<compile_context>
chip_gen: v7x
topology: tpu7x:2x2x1
jax: 0.10.0
libtpu: 0.0.40
codegen_flags: <defaults>
</compile_context>

<pallas_src>
import math

import jax
import jax.numpy as jnp
from jax.experimental import pallas as pl
from jax.experimental.pallas import tpu as pltpu

_LANE = 128
_SUB = 8


def _round_up(x, m):
    return ((x + m - 1) // m) * m


def _tile_batch(B):
    """Batch tile (tb) and padded batch (bp).

    Grid gets >= 2 steps whenever bp >= 32 so both v7x TensorCores see work;
    tiles are capped at 1024 rows (double-buffered (1024, D) f32 in/out blocks
    are far under any generation's VMEM budget).
    """
    bp = _round_up(B, _SUB)
    if bp >= 4 * _SUB:
        tb = min(1024, _round_up((bp + 1) // 2, _SUB))
    else:
        tb = bp
    bp = _round_up(bp, tb)
    return tb, bp


# --------------------------------------------------------------------------
# Kernel bodies.  Shared math: two MXU matmuls (f32 accumulate) with the time
# conditioning folded in as a rank-1 VPU term, then EUP tanh / softplus.
# Padded hidden columns are inert: zero columns of W1/wt/b1 give tanh(0)=0,
# which multiplies zero rows of W2.
# --------------------------------------------------------------------------
def _rhs_math(y, t_term, w1_ref, b1_ref, w2_ref, b2_ref):
    h = jnp.tanh(
        jnp.dot(y, w1_ref[...], preferred_element_type=jnp.float32)
        + t_term + b1_ref[...])
    z = jnp.dot(h, w2_ref[...], preferred_element_type=jnp.float32) + b2_ref[...]
    return jax.nn.softplus(z)


def _kernel_scalar_t(t_ref, y_ref, w1_ref, wt_ref, b1_ref, w2_ref, b2_ref, o_ref):
    t = t_ref[0]                                       # (1,) SMEM scalar
    o_ref[...] = _rhs_math(y_ref[...], t * wt_ref[...],
                           w1_ref, b1_ref, w2_ref, b2_ref)


def _kernel_batch_t(t_ref, y_ref, w1_ref, wt_ref, b1_ref, w2_ref, b2_ref, o_ref):
    # t_ref: (tb, 1) per-row times; broadcasts against (1, Hp) wt.
    o_ref[...] = _rhs_math(y_ref[...], t_ref[...] * wt_ref[...],
                           w1_ref, b1_ref, w2_ref, b2_ref)


def _kernel_time_grid(ts_ref, y_ref, w1_ref, wt_ref, b1_ref, w2_ref, b2_ref, o_ref):
    t = ts_ref[pl.program_id(1)]                       # (T,) SMEM time grid
    o_ref[...] = _rhs_math(y_ref[...], t * wt_ref[...],
                           w1_ref, b1_ref, w2_ref, b2_ref)


# --------------------------------------------------------------------------
# pallas_call wrappers.
# --------------------------------------------------------------------------
def _weight_specs(D, Hp, n_grid_axes):
    if n_grid_axes == 1:
        const = lambda i: (0, 0)
    else:
        const = lambda bi, ti: (0, 0)
    return [
        pl.BlockSpec((D, Hp), const),    # W1   (VMEM-resident across grid)
        pl.BlockSpec((1, Hp), const),    # wt
        pl.BlockSpec((1, Hp), const),    # b1
        pl.BlockSpec((Hp, D), const),    # W2
        pl.BlockSpec((1, D), const),     # b2
    ]


def _cost(bp, D, Hp, n_evals=1):
    flops = 4 * bp * D * Hp * n_evals
    trans = (bp * Hp + 2 * bp * D) * n_evals
    byts = (bp * D * 4                       # y read
            + bp * D * 4 * n_evals           # outputs
            + (D * Hp + 2 * Hp + Hp * D + D) * 4)
    return pl.CostEstimate(flops=flops, transcendentals=trans,
                           bytes_accessed=byts)


@jax.jit
def _rhs_scalar_t(t1, y, w1, wt, b1, w2, b2):
    B, D = y.shape
    Hp = w1.shape[1]
    tb, bp = _tile_batch(B)
    yp = y if bp == B else jnp.pad(y, ((0, bp - B), (0, 0)))
    out = pl.pallas_call(
        _kernel_scalar_t,
        out_shape=jax.ShapeDtypeStruct((bp, D), jnp.float32),
        grid=(bp // tb,),
        in_specs=[pl.BlockSpec(memory_space=pltpu.MemorySpace.SMEM),   # t (1,)
                  pl.BlockSpec((tb, D), lambda i: (i, 0))]             # y
                 + _weight_specs(D, Hp, 1),
        out_specs=pl.BlockSpec((tb, D), lambda i: (i, 0)),
        compiler_params=pltpu.CompilerParams(dimension_semantics=("parallel",)),
        cost_estimate=_cost(bp, D, Hp),
    )(t1, yp, w1, wt, b1, w2, b2)
    return out if bp == B else out[:B]


@jax.jit
def _rhs_batch_t(t_col, y, w1, wt, b1, w2, b2):
    B, D = y.shape
    Hp = w1.shape[1]
    tb, bp = _tile_batch(B)
    if bp != B:
        y = jnp.pad(y, ((0, bp - B), (0, 0)))
        t_col = jnp.pad(t_col, ((0, bp - B), (0, 0)))
    out = pl.pallas_call(
        _kernel_batch_t,
        out_shape=jax.ShapeDtypeStruct((bp, D), jnp.float32),
        grid=(bp // tb,),
        in_specs=[pl.BlockSpec((tb, 1), lambda i: (i, 0)),             # t_col
                  pl.BlockSpec((tb, D), lambda i: (i, 0))]             # y
                 + _weight_specs(D, Hp, 1),
        out_specs=pl.BlockSpec((tb, D), lambda i: (i, 0)),
        compiler_params=pltpu.CompilerParams(dimension_semantics=("parallel",)),
        cost_estimate=_cost(bp, D, Hp),
    )(t_col, y, w1, wt, b1, w2, b2)
    return out if bp == B else out[:B]


@jax.jit
def _rhs_time_grid(ts, y, w1, wt, b1, w2, b2):
    """Fused RHS evaluation at T times in a single pallas_call -> (T, bp, D)."""
    T = ts.shape[0]
    B, D = y.shape
    Hp = w1.shape[1]
    tb, bp = _tile_batch(B)
    yp = y if bp == B else jnp.pad(y, ((0, bp - B), (0, 0)))
    out = pl.pallas_call(
        _kernel_time_grid,
        out_shape=jax.ShapeDtypeStruct((T, bp, D), jnp.float32),
        # Time is the inner grid axis: y and the weights stay VMEM-resident
        # for a whole batch tile while all T evaluations are produced.
        grid=(bp // tb, T),
        in_specs=[pl.BlockSpec(memory_space=pltpu.MemorySpace.SMEM),   # ts (T,)
                  pl.BlockSpec((tb, D), lambda bi, ti: (bi, 0))]       # y
                 + _weight_specs(D, Hp, 2),
        out_specs=pl.BlockSpec((None, tb, D), lambda bi, ti: (ti, bi, 0)),
        compiler_params=pltpu.CompilerParams(
            dimension_semantics=("parallel", "parallel")),
        cost_estimate=_cost(bp, D, Hp, n_evals=T),
    )(ts, yp, w1, wt, b1, w2, b2)
    return out if bp == B else out[:, :B, :]


# --------------------------------------------------------------------------
# Base class — mirrors the PyTorch module exactly (abstract forward).
# --------------------------------------------------------------------------
class BaseSurvODEFunc:

    def __init__(self, config):
        self.nfe = 0
        self.batch_time_mode = False
        self.config = config

    def set_batch_time_mode(self, mode=True):
        self.batch_time_mode = mode

    def reset_nfe(self):
        self.nfe = 0

    def forward(self, t, y):
        # Abstract in the PyTorch spec; concrete compute lives in the
        # Pallas-backed subclass below.
        raise NotImplementedError('Not implemented.')

    def __call__(self, t, y):
        return self.forward(t, y)


# --------------------------------------------------------------------------
# Concrete subclass: SODEN-style hazard ODE function, Pallas hot path.
# --------------------------------------------------------------------------
class SurvODEFuncMLP(BaseSurvODEFunc):

    def __init__(self, config, key):
        super().__init__(config)
        D = int(config["hidden_size"])
        H = int(config["mlp_size"])
        self.D, self.H = D, H
        # Lane-dense hidden width (VMEM intermediate only; never hits HBM
        # beyond the one-time weight upload).  If H ever grows past 128,
        # round to 256 on v6e/v7x to fill their 2x256^2 MXUs.
        self.Hp = _round_up(H, _LANE)

        k1, k2, k3, k4, k5 = jax.random.split(key, 5)
        s1 = 1.0 / math.sqrt(D + 1)          # fan_in of [y | t]
        s2 = 1.0 / math.sqrt(H)

        def unif(k, shape, s):
            return jax.random.uniform(k, shape, jnp.float32, -s, s)

        # Zero-padding of the hidden dim is inert (see kernel comment).
        w1 = jnp.zeros((D, self.Hp), jnp.float32).at[:, :H].set(unif(k1, (D, H), s1))
        wt = jnp.zeros((1, self.Hp), jnp.float32).at[:, :H].set(unif(k2, (1, H), s1))
        b1 = jnp.zeros((1, self.Hp), jnp.float32).at[:, :H].set(unif(k3, (1, H), s1))
        w2 = jnp.zeros((self.Hp, D), jnp.float32).at[:H, :].set(unif(k4, (H, D), s2))
        b2 = unif(k5, (1, D), s2)
        self.w1, self.wt, self.b1, self.w2, self.b2 = w1, wt, b1, w2, b2

    def forward(self, t, y):
        # NOTE: the Python-side nfe counter only stays correct because forward
        # itself is not jitted (only the inner Pallas wrappers are).
        self.nfe += 1
        y = jnp.asarray(y, jnp.float32)
        t = jnp.asarray(t, jnp.float32)
        if self.batch_time_mode:
            t_col = t.reshape(y.shape[0], 1)                 # one t per row
            return _rhs_batch_t(t_col, y, self.w1, self.wt, self.b1,
                                self.w2, self.b2)
        t1 = t.reshape(1)                                    # scalar t -> SMEM
        return _rhs_scalar_t(t1, y, self.w1, self.wt, self.b1,
                             self.w2, self.b2)

    def forward_times(self, ts, y):
        """Fused RHS evaluation on a whole time grid: returns (T, B, D).

        One pallas_call for all T evaluations; amortizes per-call dispatch
        (the dominant cost of an ODE solve at these sizes).
        """
        ts = jnp.asarray(ts, jnp.float32).reshape(-1)
        self.nfe += int(ts.shape[0])
        y = jnp.asarray(y, jnp.float32)
        return _rhs_time_grid(ts, y, self.w1, self.wt, self.b1,
                              self.w2, self.b2)


# --------------------------------------------------------------------------
# Pure-JAX reference (identical f32 math).
# --------------------------------------------------------------------------
def _reference(t_col, y, func):
    pre = y @ func.w1 + t_col * func.wt + func.b1
    h = jnp.tanh(pre)
    z = h @ func.w2 + func.b2
    return jax.nn.softplus(z)


if __name__ == "__main__":
    config = {"hidden_size": 32, "mlp_size": 32}
    key = jax.random.PRNGKey(0)
    k_param, k_y, k_t = jax.random.split(key, 3)

    func = SurvODEFuncMLP(config, k_param)

    B, D = 8, config["hidden_size"]
    y = jax.random.normal(k_y, (B, D), jnp.float32)

    # 1) scalar-time mode (default; a single odeint evaluation time)
    t_scalar = jnp.float32(0.5)
    dy = jax.block_until_ready(func(t_scalar, y))

    # 2) batch-time mode (one time per batch element)
    func.set_batch_time_mode(True)
    t_batch = jax.random.uniform(k_t, (B,), jnp.float32)
    dy_b = jax.block_until_ready(func(t_batch, y))
    func.set_batch_time_mode(False)

    # 3) fused time-grid evaluation (all T RHS evals in one pallas_call)
    ts = jnp.linspace(0.0, 1.0, 4, dtype=jnp.float32)
    dy_ts = jax.block_until_ready(func.forward_times(ts, y))

    # checks against the pure-JAX reference
    ref = _reference(jnp.full((B, 1), t_scalar, jnp.float32), y, func)
    ref_b = _reference(t_batch.reshape(B, 1), y, func)
    ref_ts = jnp.stack([_reference(jnp.full((B, 1), t, jnp.float32), y, func)
                        for t in ts])
    assert dy.shape == (B, D) and dy_b.shape == (B, D)
    assert dy_ts.shape == (int(ts.shape[0]), B, D)
    assert jnp.allclose(dy, ref, atol=2e-3, rtol=2e-3)
    assert jnp.allclose(dy_b, ref_b, atol=2e-3, rtol=2e-3)
    assert jnp.allclose(dy_ts, ref_ts, atol=2e-3, rtol=2e-3)
    assert func.nfe == 2 + int(ts.shape[0])

    # abstract base-class forward still raises, as in the PyTorch spec
    try:
        BaseSurvODEFunc(config)(t_scalar, y)
        raise AssertionError("base forward should have raised")
    except NotImplementedError:
        pass

    print("KERNEL_OK")
</pallas_src>

<mosaic_0001>
module attributes {stable_mosaic.version = 11 : i64} {
  func.func @_kernel_scalar_t(%arg0: i32, %arg1: memref<1xf32, #tpu.memory_space<smem>>, %arg2: memref<8x32xf32, #tpu.memory_space<vmem>>, %arg3: memref<32x128xf32, #tpu.memory_space<vmem>>, %arg4: memref<1x128xf32, #tpu.memory_space<vmem>>, %arg5: memref<1x128xf32, #tpu.memory_space<vmem>>, %arg6: memref<128x32xf32, #tpu.memory_space<vmem>>, %arg7: memref<1x32xf32, #tpu.memory_space<vmem>>, %arg8: memref<8x32xf32, #tpu.memory_space<vmem>>) attributes {dimension_semantics = [#tpu.dimension_semantics<parallel>], iteration_bounds = array<i64: 1>, scalar_prefetch = 0 : i64, scratch_operands = 0 : i64, tpu.core_type = #tpu.core_type<tc>, window_params = [{transform_indices = @transform_0, window_bounds = array<i64: 1>}, {transform_indices = @transform_1, window_bounds = array<i64: 8, 32>}, {pipeline_mode = #tpu.pipeline_mode<synchronous>, transform_indices = @transform_2, window_bounds = array<i64: 32, 128>}, {pipeline_mode = #tpu.pipeline_mode<synchronous>, transform_indices = @transform_3, window_bounds = array<i64: 1, 128>}, {pipeline_mode = #tpu.pipeline_mode<synchronous>, transform_indices = @transform_4, window_bounds = array<i64: 1, 128>}, {pipeline_mode = #tpu.pipeline_mode<synchronous>, transform_indices = @transform_5, window_bounds = array<i64: 128, 32>}, {pipeline_mode = #tpu.pipeline_mode<synchronous>, transform_indices = @transform_6, window_bounds = array<i64: 1, 32>}, {transform_indices = @transform_7, window_bounds = array<i64: 8, 32>}]} {
    %c0 = arith.constant 0 : index
    %0 = memref.load %arg1[%c0] : memref<1xf32, #tpu.memory_space<smem>>
    %c0_0 = arith.constant 0 : index
    %c0_1 = arith.constant 0 : index
    %1 = vector.load %arg2[%c0_0, %c0_1] : memref<8x32xf32, #tpu.memory_space<vmem>>, vector<8x32xf32>
    %c0_2 = arith.constant 0 : index
    %c0_3 = arith.constant 0 : index
    %2 = vector.load %arg4[%c0_2, %c0_3] : memref<1x128xf32, #tpu.memory_space<vmem>>, vector<1x128xf32>
    %3 = vector.broadcast %0 : f32 to vector<1x128xf32>
    %4 = arith.mulf %3, %2 : vector<1x128xf32>
    %c0_4 = arith.constant 0 : index
    %c0_5 = arith.constant 0 : index
    %5 = vector.load %arg3[%c0_4, %c0_5] : memref<32x128xf32, #tpu.memory_space<vmem>>, vector<32x128xf32>
    %cst = arith.constant dense<0.000000e+00> : vector<8x128xf32>
    %6 = tpu.matmul %1, %5, %cst {dimension_numbers = #tpu.dot_dimension_numbers<[1], [0], [0], [1], [0, 0, 1, 1], [], []>} : vector<8x32xf32>, vector<32x128xf32>, vector<8x128xf32> -> vector<8x128xf32>
    %7 = vector.broadcast %4 : vector<1x128xf32> to vector<8x128xf32>
    %8 = arith.addf %6, %7 : vector<8x128xf32>
    %c0_6 = arith.constant 0 : index
    %c0_7 = arith.constant 0 : index
    %9 = vector.load %arg5[%c0_6, %c0_7] : memref<1x128xf32, #tpu.memory_space<vmem>>, vector<1x128xf32>
    %10 = vector.broadcast %9 : vector<1x128xf32> to vector<8x128xf32>
    %11 = arith.addf %8, %10 : vector<8x128xf32>
    %12 = math.tanh %11 : vector<8x128xf32>
    %c0_8 = arith.constant 0 : index
    %c0_9 = arith.constant 0 : index
    %13 = vector.load %arg6[%c0_8, %c0_9] : memref<128x32xf32, #tpu.memory_space<vmem>>, vector<128x32xf32>
    %cst_10 = arith.constant dense<0.000000e+00> : vector<8x32xf32>
    %14 = tpu.matmul %12, %13, %cst_10 {dimension_numbers = #tpu.dot_dimension_numbers<[1], [0], [0], [1], [0, 0, 1, 1], [], []>} : vector<8x128xf32>, vector<128x32xf32>, vector<8x32xf32> -> vector<8x32xf32>
    %c0_11 = arith.constant 0 : index
    %c0_12 = arith.constant 0 : index
    %15 = vector.load %arg7[%c0_11, %c0_12] : memref<1x32xf32, #tpu.memory_space<vmem>>, vector<1x32xf32>
    %16 = vector.broadcast %15 : vector<1x32xf32> to vector<8x32xf32>
    %17 = arith.addf %14, %16 : vector<8x32xf32>
    %cst_13 = arith.constant 0.000000e+00 : f32
    %18 = vector.broadcast %cst_13 : f32 to vector<8x32xf32>
    %19 = arith.maximumf %17, %18 : vector<8x32xf32>
    %20 = vector.broadcast %cst_13 : f32 to vector<8x32xf32>
    %21 = arith.subf %17, %20 : vector<8x32xf32>
    %22 = arith.cmpf one, %21, %21 : vector<8x32xf32>
    %23 = vector.broadcast %cst_13 : f32 to vector<8x32xf32>
    %24 = arith.addf %17, %23 : vector<8x32xf32>
    %25 = math.absf %21 : vector<8x32xf32>
    %cst_14 = arith.constant 0.000000e+00 : f32
    %26 = vector.broadcast %cst_14 : f32 to vector<8x32xf32>
    %27 = arith.subf %26, %25 : vector<8x32xf32>
    %28 = math.exp %27 : vector<8x32xf32>
    %29 = math.log1p %28 : vector<8x32xf32>
    %30 = arith.addf %19, %29 : vector<8x32xf32>
    %31 = arith.select %22, %24, %30 : vector<8x32xi1>, vector<8x32xf32>
    %c0_15 = arith.constant 0 : index
    %c0_16 = arith.constant 0 : index
    %32 = vector.load %arg8[%c0_15, %c0_16] : memref<8x32xf32, #tpu.memory_space<vmem>>, vector<8x32xf32>
    tpu.vector_store %arg8[%c0_15, %c0_16], %31 {strides = array<i32>} : memref<8x32xf32, #tpu.memory_space<vmem>>, vector<8x32xf32>,
    return
  }
  func.func @transform_0(%arg0: i32) -> i32 {
    %c0_i32 = arith.constant 0 : i32
    %c0_i32_0 = arith.constant 0 : i32
    return %c0_i32 : i32
  }
  func.func @transform_1(%arg0: i32) -> (i32, i32) {
    %c0_i32 = arith.constant 0 : i32
    %c0_i32_0 = arith.constant 0 : i32
    return %arg0, %c0_i32 : i32, i32
  }
  func.func @transform_2(%arg0: i32) -> (i32, i32) {
    %c0_i32 = arith.constant 0 : i32
    %c0_i32_0 = arith.constant 0 : i32
    %c0_i32_1 = arith.constant 0 : i32
    return %c0_i32, %c0_i32_0 : i32, i32
  }
  func.func @transform_3(%arg0: i32) -> (i32, i32) {
    %c0_i32 = arith.constant 0 : i32
    %c0_i32_0 = arith.constant 0 : i32
    %c0_i32_1 = arith.constant 0 : i32
    return %c0_i32, %c0_i32_0 : i32, i32
  }
  func.func @transform_4(%arg0: i32) -> (i32, i32) {
    %c0_i32 = arith.constant 0 : i32
    %c0_i32_0 = arith.constant 0 : i32
    %c0_i32_1 = arith.constant 0 : i32
    return %c0_i32, %c0_i32_0 : i32, i32
  }
  func.func @transform_5(%arg0: i32) -> (i32, i32) {
    %c0_i32 = arith.constant 0 : i32
    %c0_i32_0 = arith.constant 0 : i32
    %c0_i32_1 = arith.constant 0 : i32
    return %c0_i32, %c0_i32_0 : i32, i32
  }
  func.func @transform_6(%arg0: i32) -> (i32, i32) {
    %c0_i32 = arith.constant 0 : i32
    %c0_i32_0 = arith.constant 0 : i32
    %c0_i32_1 = arith.constant 0 : i32
    return %c0_i32, %c0_i32_0 : i32, i32
  }
  func.func @transform_7(%arg0: i32) -> (i32, i32) {
    %c0_i32 = arith.constant 0 : i32
    %c0_i32_0 = arith.constant 0 : i32
    return %arg0, %c0_i32 : i32, i32
  }
}

</mosaic_0001>

<llo_original>
// kernel: _rhs_scalar_t.1
$region0: #{_rhs_scalar_t.1}
  #allocation0 [shape = 'u32[]', space=smem, size = 0x4, offset = 0x4, fixed_abs, tag = 'smem constant byte address 0x4 - core index']
  #allocation1 [shape = 'u32[144,128]{1,0:T(1,128)}', space=vmem, size = 0x12000, scoped, tag = 'internal scratch']
  #allocation2 [shape = 'f32[1]{0:T(128)S(6)}', space=smem, size = 0x200, scoped, tag = 'scoped memory for _rhs_scalar_t.1']
  %s0 = inlined_call_operand.<no memory space> [shape: f32[1], index: 0, kind: input, shape index: {}]
  %s1 = inlined_call_operand.vmem [shape: f32[8,32], index: 1, kind: input, shape index: {}]
  %s2 = inlined_call_operand.vmem [shape: f32[32,128], index: 2, kind: input, shape index: {}]
  %s3 = inlined_call_operand.vmem [shape: f32[1,128], index: 3, kind: input, shape index: {}]
  %s4 = inlined_call_operand.vmem [shape: f32[1,128], index: 4, kind: input, shape index: {}]
  %s5 = inlined_call_operand.vmem [shape: f32[128,32], index: 5, kind: input, shape index: {}]
  %s6 = inlined_call_operand.vmem [shape: f32[1,32], index: 6, kind: input, shape index: {}]
  %s7 = inlined_call_operand.hbm [shape: f32[8,32], index: 7, kind: output, shape index: {}]
  %s8 = sld [smem:[#allocation0]]
  $region38: #{_rhs_scalar_t.1} parent=0
    _
  %s10 = ssub.s32 1, %s8
  %s11 = scalar_select 0, %s10, %s8
  %12 = sst [smem:[#allocation2]] %s0
  $region1: #{_rhs_scalar_t.1} parent=0
    #allocation3 [shape = 'u8[4096]{0}', space=vmem, size = 0x1000, scoped, tag = 'output window, operand 0, single buffered']
    #allocation4 [shape = 's32[1]{0}', space=sflag, size = 0x4, scoped, tag = 'scoped memory for _rhs_scalar_t.1']
    %13 = vsyncpa [#allocation4], 0
    // Predicated region
    $region2: #{_rhs_scalar_t.1} parent=1 // pred_check
      _
    $region3: #{_rhs_scalar_t.1} parent=1 // pred_check_branch
      %15 = sbr.rel (0) target = $region5
    $region4: #{_rhs_scalar_t.1} parent=1 // pred_region
      _
    $region5: #{_rhs_scalar_t.1} parent=1 // pred_fallthru
      _
    // Predicated region
    $region6: #{_rhs_scalar_t.1} parent=1 // pred_check
      _
    $region7: #{_rhs_scalar_t.1} parent=1 // pred_check_branch
      %17 = sbr.rel (0) target = $region9
    $region8: #{_rhs_scalar_t.1} parent=1 // pred_region
      _
    $region9: #{_rhs_scalar_t.1} parent=1 // pred_fallthru
      _
    // Predicated region
    $region10: #{_rhs_scalar_t.1} parent=1 // pred_check
      _
    $region11: #{_rhs_scalar_t.1} parent=1 // pred_check_branch
      %19 = sbr.rel (0) target = $region13
    $region12: #{_rhs_scalar_t.1} parent=1 // pred_region
      _
    $region13: #{_rhs_scalar_t.1} parent=1 // pred_fallthru
      _
    // Predicated region
    $region14: #{_rhs_scalar_t.1} parent=1 // pred_check
      _
    $region15: #{_rhs_scalar_t.1} parent=1 // pred_check_branch
      %21 = sbr.rel (0) target = $region17
    $region16: #{_rhs_scalar_t.1} parent=1 // pred_region
      _
    $region17: #{_rhs_scalar_t.1} parent=1 // pred_fallthru
      _
    // Predicated region
    $region18: #{_rhs_scalar_t.1} parent=1 // pred_check
      _
    $region19: #{_rhs_scalar_t.1} parent=1 // pred_check_branch
      %23 = sbr.rel (0) target = $region21
    $region20: #{_rhs_scalar_t.1} parent=1 // pred_region
      _
    $region21: #{_rhs_scalar_t.1} parent=1 // pred_fallthru
      _
    // Predicated region
    $region22: #{_rhs_scalar_t.1} parent=1 // pred_check
      _
    $region23: #{_rhs_scalar_t.1} parent=1 // pred_check_branch
      %25 = sbr.rel (0) target = $region25
    $region24: #{_rhs_scalar_t.1} parent=1 // pred_region
      _
    $region25: #{_rhs_scalar_t.1} parent=1 // pred_fallthru
      _
    // Predicated region
    $region26: #{_rhs_scalar_t.1} parent=1 // pred_check
      _
    $region27: #{_rhs_scalar_t.1} parent=1 // pred_check_branch
      %27 = sbr.rel (0) target = $region29
    $region28: #{_rhs_scalar_t.1} parent=1 // pred_region
      _
    $region29: #{_rhs_scalar_t.1} parent=1 // pred_fallthru
      _
    %s28 = sld [smem:[#allocation2]]
    %v29 = vld [vmem:[%s1] sm:$0xff]
    %v30 = vld [vmem:[%s3] sm:$0x1]
    %v31 = vstv %s28
    %v32 = vmul.f32 %v31, %v30
    %v33 = vld [vmem:[%s2] sm:$0xff]
    %v34 = vld [vmem:[%s2 + $0x8] sm:$0xff]
    %v35 = vld [vmem:[%s2 + $0x10] sm:$0xff]
    %v36 = vld [vmem:[%s2 + $0x18] sm:$0xff]
    %v38 = vlaneseq
    %v39 = vshrl.u32 %v38, 7
    %v40 = vsub.s32 0, %v39
    %v41 = vrot.slane %v32, %v40
    %vm43 = vcmask 261120
    %v45 = vsel %vm43, %v29, 0
    %47 = vmatprep.subr.mxu0 0.0
    %48 = vmatpush1.msra.mxu0 %v33
    %49 = vmatprep.subr.mxu0 0.0
    %50 = vmatpush1.msra.mxu0 %v34
    %51 = vmatprep.subr.mxu0 0.0
    %52 = vmatpush1.msra.mxu0 %v35
    %53 = vmatprep.subr.mxu0 0.0
    %54 = vmatpush1.msra.mxu0 %v36
    %55 = vmatprep.subr.mxu0 0.0
    %56 = vmatpush1.msra.mxu0 0.0
    %57 = vmatprep.subr.mxu0 0.0
    %58 = vmatpush1.msra.mxu0 0.0
    %59 = vmatprep.subr.mxu0 0.0
    %60 = vmatpush1.msra.mxu0 0.0
    %61 = vmatprep.subr.mxu0 0.0
    %62 = vmatpush1.msra.mxu0 0.0
    %63 = vmatprep.subr.mxu0 0.0
    %64 = vmatpush1.msra.mxu0 0.0
    %65 = vmatprep.subr.mxu0 0.0
    %66 = vmatpush1.msra.mxu0 0.0
    %67 = vmatprep.subr.mxu0 0.0
    %68 = vmatpush1.msra.mxu0 0.0
    %69 = vmatprep.subr.mxu0 0.0
    %70 = vmatpush1.msra.mxu0 0.0
    %71 = vmatprep.subr.mxu0 0.0
    %72 = vmatpush1.msra.mxu0 0.0
    %73 = vmatprep.subr.mxu0 0.0
    %74 = vmatpush1.msra.mxu0 0.0
    %75 = vmatprep.subr.mxu0 0.0
    %76 = vmatpush1.msra.mxu0 0.0
    %77 = vmatprep.subr.mxu0 0.0
    %78 = vmatpush1.msra.mxu0 0.0
    %79 = vmatprep.subr.mxu0 0.0
    %80 = vmatpush1.msra.mxu0 0.0
    %81 = vmatprep.subr.mxu0 0.0
    %82 = vmatpush1.msra.mxu0 0.0
    %83 = vmatprep.subr.mxu0 0.0
    %84 = vmatpush1.msra.mxu0 0.0
    %85 = vmatprep.subr.mxu0 0.0
    %86 = vmatpush1.msra.mxu0 0.0
    %87 = vmatprep.subr.mxu0 0.0
    %88 = vmatpush1.msra.mxu0 0.0
    %89 = vmatprep.subr.mxu0 0.0
    %90 = vmatpush1.msra.mxu0 0.0
    %91 = vmatprep.subr.mxu0 0.0
    %92 = vmatpush1.msra.mxu0 0.0
    %93 = vmatprep.subr.mxu0 0.0
    %94 = vmatpush1.msra.mxu0 0.0
    %95 = vmatprep.subr.mxu0 0.0
    %96 = vmatpush1.msra.mxu0 0.0
    %97 = vmatprep.subr.mxu0 0.0
    %98 = vmatpush1.msra.mxu0 0.0
    %99 = vmatprep.subr.mxu0 0.0
    %100 = vmatpush1.msra.mxu0 0.0
    %101 = vmatprep.subr.mxu0 0.0
    %102 = vmatpush1.msra.mxu0 0.0
    %103 = vmatprep.subr.mxu0 0.0
    %104 = vmatpush1.msra.mxu0 0.0
    %105 = vmatprep.subr.mxu0 0.0
    %106 = vmatpush1.msra.mxu0 0.0
    %107 = vmatprep.subr.mxu0 0.0
    %108 = vmatpush1.msra.mxu0 0.0
    %109 = vmatprep.subr.mxu0 0.0
    %110 = vmatpush1.msra.mxu0 0.0
    %111 = vmatprep.mubr.f32.mxu0 0.0
    %112 = vmatmul.mubr.f32.gmra.mrb[0].mxu0 %v45
    %v113 = vpop.f32.mrb[0].mxu0
    %v114 = vadd.f32 %v41, %v113
    %v115 = vpop.f32.mrb[0].mxu0
    %116 = vdwg.mxu0
    %v117 = vld [vmem:[%s4] sm:$0x1]
    %v119 = vlaneseq
    %v120 = vshrl.u32 %v119, 7
    %v121 = vsub.s32 0, %v120
    %v122 = vrot.slane %v117, %v121
    %v124 = vadd.f32 %v114, %v122
    %v125 = vtanh.pop %v124
    %v126 = vld [vmem:[%s5] sm:$0xff]
    %v127 = vld [vmem:[%s5 + $0x8] sm:$0xff]
    %v128 = vld [vmem:[%s5 + $0x10] sm:$0xff]
    %v129 = vld [vmem:[%s5 + $0x18] sm:$0xff]
    %v130 = vld [vmem:[%s5 + $0x20] sm:$0xff]
    %v131 = vld [vmem:[%s5 + $0x28] sm:$0xff]
    %v132 = vld [vmem:[%s5 + $0x30] sm:$0xff]
    %v133 = vld [vmem:[%s5 + $0x38] sm:$0xff]
    %v134 = vld [vmem:[%s5 + $0x40] sm:$0xff]
    %v135 = vld [vmem:[%s5 + $0x48] sm:$0xff]
    %v136 = vld [vmem:[%s5 + $0x50] sm:$0xff]
    %v137 = vld [vmem:[%s5 + $0x58] sm:$0xff]
    %v138 = vld [vmem:[%s5 + $0x60] sm:$0xff]
    %v139 = vld [vmem:[%s5 + $0x68] sm:$0xff]
    %v140 = vld [vmem:[%s5 + $0x70] sm:$0xff]
    %v141 = vld [vmem:[%s5 + $0x78] sm:$0xff]
    %v142 = vld [vmem:[%s6] sm:$0x1]
    %v144 = vlaneseq
    %v145 = vshrl.u32 %v144, 7
    %v146 = vsub.s32 0, %v145
    %v147 = vrot.slane %v142, %v146
    %149 = vmatprep.subr.mxu0 0.0
    %150 = vmatpush1.msra.mxu0 %v126
    %151 = vmatprep.subr.mxu0 0.0
    %152 = vmatpush1.msra.mxu0 %v127
    %153 = vmatprep.subr.mxu0 0.0
    %154 = vmatpush1.msra.mxu0 %v128
    %155 = vmatprep.subr.mxu0 0.0
    %156 = vmatpush1.msra.mxu0 %v129
    %157 = vmatprep.subr.mxu0 0.0
    %158 = vmatpush1.msra.mxu0 %v130
    %159 = vmatprep.subr.mxu0 0.0
    %160 = vmatpush1.msra.mxu0 %v131
    %161 = vmatprep.subr.mxu0 0.0
    %162 = vmatpush1.msra.mxu0 %v132
    %163 = vmatprep.subr.mxu0 0.0
    %164 = vmatpush1.msra.mxu0 %v133
    %165 = vmatprep.subr.mxu0 0.0
    %166 = vmatpush1.msra.mxu0 %v134
    %167 = vmatprep.subr.mxu0 0.0
    %168 = vmatpush1.msra.mxu0 %v135
    %169 = vmatprep.subr.mxu0 0.0
    %170 = vmatpush1.msra.mxu0 %v136
    %171 = vmatprep.subr.mxu0 0.0
    %172 = vmatpush1.msra.mxu0 %v137
    %173 = vmatprep.subr.mxu0 0.0
    %174 = vmatpush1.msra.mxu0 %v138
    %175 = vmatprep.subr.mxu0 0.0
    %176 = vmatpush1.msra.mxu0 %v139
    %177 = vmatprep.subr.mxu0 0.0
    %178 = vmatpush1.msra.mxu0 %v140
    %179 = vmatprep.subr.mxu0 0.0
    %180 = vmatpush1.msra.mxu0 %v141
    %181 = vmatprep.subr.mxu0 0.0
    %182 = vmatpush1.msra.mxu0 0.0
    %183 = vmatprep.subr.mxu0 0.0
    %184 = vmatpush1.msra.mxu0 0.0
    %185 = vmatprep.subr.mxu0 0.0
    %186 = vmatpush1.msra.mxu0 0.0
    %187 = vmatprep.subr.mxu0 0.0
    %188 = vmatpush1.msra.mxu0 0.0
    %189 = vmatprep.subr.mxu0 0.0
    %190 = vmatpush1.msra.mxu0 0.0
    %191 = vmatprep.subr.mxu0 0.0
    %192 = vmatpush1.msra.mxu0 0.0
    %193 = vmatprep.subr.mxu0 0.0
    %194 = vmatpush1.msra.mxu0 0.0
    %195 = vmatprep.subr.mxu0 0.0
    %196 = vmatpush1.msra.mxu0 0.0
    %197 = vmatprep.subr.mxu0 0.0
    %198 = vmatpush1.msra.mxu0 0.0
    %199 = vmatprep.subr.mxu0 0.0
    %200 = vmatpush1.msra.mxu0 0.0
    %201 = vmatprep.subr.mxu0 0.0
    %202 = vmatpush1.msra.mxu0 0.0
    %203 = vmatprep.subr.mxu0 0.0
    %204 = vmatpush1.msra.mxu0 0.0
    %205 = vmatprep.subr.mxu0 0.0
    %206 = vmatpush1.msra.mxu0 0.0
    %207 = vmatprep.subr.mxu0 0.0
    %208 = vmatpush1.msra.mxu0 0.0
    %209 = vmatprep.subr.mxu0 0.0
    %210 = vmatpush1.msra.mxu0 0.0
    %211 = vmatprep.subr.mxu0 0.0
    %212 = vmatpush1.msra.mxu0 0.0
    %213 = vmatprep.mubr.f32.mxu0 0.0
    %214 = vmatmul.mubr.f32.gmra.mrb[0].mxu0 %v125
    %v215 = vpop.f32.mrb[0].mxu0
    %v216 = vadd.f32 %v147, %v215
    %v217 = vpop.f32.mrb[0].mxu0
    %218 = vdwg.mxu0
    %v219 = vmax.f32 %v216, 0.0
    %vm220 = vcmp.ne.f32.partialorder %v216, %v216
    %v221 = vadd.f32 %v216, 0.0
    %v222 = vand.u32 2147483647, %v216
    %v223 = vsub.f32 0.0, %v222
    %v224 = vmul.f32 %v223, 1.442695
    %v225 = vpow.pop %v224
    %v226 = vadd.f32 %v225, 1.0
    %v227 = vlog2.pop %v226
    %v228 = vmul.f32 %v227, 0.6931472
    %v229 = vmul.f32 -0.5, %v225
    %v230 = vadd.f32 %v229, 1.0
    %v231 = vmul.f32 %v230, %v225
    %v232 = vand.u32 2147483647, %v225
    %vm233 = vcmp.lt.f32.partialorder %v232, 0.0004427343
    %v234 = vsel %vm233, %v231, %v228
    %v235 = vadd.f32 %v219, %v234
    %v236 = vsel %vm220, %v221, %v235
    %237 = vst.msk [vmem:[#allocation3] sm:$0xff] %vm43, %v236
    // Predicated region
    $region30: #{_rhs_scalar_t.1} parent=1 // pred_check
      _
    $region31: #{_rhs_scalar_t.1} parent=1 // pred_check_branch
      %239 = sbr.rel (0) target = $region33
    $region32: #{_rhs_scalar_t.1} parent=1 // pred_region
      %s241 = ssub.s32 128, 128
      %242 = vsyncadd [#allocation4], %s241
      %s244 = sshll.u32 [#allocation3], 4
      %s245 = int_to_ptr.vmem [resolvable:$true] %s244
      %247 = dma.vmem_to_hbm [thread:$0]  %s245, 128, %s7, [#allocation4]
    $region33: #{_rhs_scalar_t.1} parent=1 // pred_fallthru
      _
    // Predicated region
    $region34: #{_rhs_scalar_t.1} parent=1 // pred_check
      _
    $region35: #{_rhs_scalar_t.1} parent=1 // pred_check_branch
      %249 = sbr.rel (0) target = $region37
    $region36: #{_rhs_scalar_t.1} parent=1 // pred_region
      %250 = dma.done [#allocation4], 128
    $region37: #{_rhs_scalar_t.1} parent=1 // pred_fallthru
      _
    %251 = vsyncpa [#allocation4], 1

</llo_original>
